<compile_context>
chip_gen: v6e
topology: v6e:2x2x1
jax: 0.10.0
libtpu: 0.0.40
codegen_flags: <defaults>
</compile_context>

<pallas_src>
import jax
import jax.numpy as jnp
from jax import lax
from jax.experimental import pallas as pl
from jax.experimental.pallas import tpu as pltpu


# ----------------------------- Pallas kernels ------------------------------ #

def _conv3x3_s2_kernel(band_ref, halo_ref, w_ref, b_ref, o_ref, patch_ref):
    """Fused in-VMEM im2col + one big MXU dot for Conv2d(k=3,s=2,p=1) on a row tile.

    band_ref : (1, tr, 2, Wo+1, 2*Cin) bf16 -- row-pairs [j*tr, (j+1)*tr) of the
               zero-padded NHWC image; parity axis = even/odd padded row; last axis
               packs [even padded column channels (Cin) | odd padded column (Cin)].
    halo_ref : (1, 1, 1, Wo+1, 2*Cin) bf16 -- even row-pair (j+1)*tr (bottom halo
               row needed by the dy=2 taps of the last output row of the tile).
    w_ref    : (9*Cin, Cout) bf16 -- taps reordered to match the patch K layout.
    b_ref    : (1, Cout) f32.
    o_ref    : (1, tr*Wo, Cout) -- row-major (row, col) flattened output tile.
    patch_ref: (tr, Wo, 9*Cin) bf16 VMEM scratch -- in-VMEM im2col of the tile.
    """
    tr = band_ref.shape[1]
    wo = band_ref.shape[3] - 1
    cin = band_ref.shape[4] // 2

    # Patch K layout:
    #   [ (dy=0,dx=0..1) 2Cin | (dy=1,dx=0..1) 2Cin | (dy=2,dx=0..1) 2Cin
    #   | (dy=0,dx=2) Cin     | (dy=1,dx=2) Cin     | (dy=2,dx=2) Cin ]
    # dy = 0, 1: same row-pairs as the output rows (parity == dy).  The dx=0/1 pair
    # is a single full-lane copy; dx=2 reads the lane-aligned [0:Cin] prefix of the
    # next column pair.
    for dy in range(2):
        patch_ref[:, :, 2 * cin * dy:2 * cin * (dy + 1)] = \
            band_ref[0, :, dy, 0:wo, :]
        patch_ref[:, :, cin * (6 + dy):cin * (7 + dy)] = \
            band_ref[0, :, dy, 1:wo + 1, 0:cin]
    # dy = 2: even rows shifted down by one row-pair; the last output row of the
    # tile takes its row from the halo operand.
    if tr > 1:
        patch_ref[0:tr - 1, :, 4 * cin:6 * cin] = band_ref[0, 1:tr, 0, 0:wo, :]
        patch_ref[0:tr - 1, :, 8 * cin:9 * cin] = band_ref[0, 1:tr, 0, 1:wo + 1, 0:cin]
    patch_ref[tr - 1:tr, :, 4 * cin:6 * cin] = halo_ref[0, :, 0, 0:wo, :]
    patch_ref[tr - 1:tr, :, 8 * cin:9 * cin] = halo_ref[0, :, 0, 1:wo + 1, 0:cin]

    # One MXU dot: M = tr*Wo, K = 9*Cin, N = Cout, f32 accumulation.  Bias add and
    # the output cast happen exactly once per tile.
    patches = patch_ref[...].reshape(tr * wo, 9 * cin)
    acc = jnp.dot(patches, w_ref[...], preferred_element_type=jnp.float32)
    o_ref[0] = (acc + b_ref[...]).astype(o_ref.dtype)


def _avgpool2x2_kernel(x_ref, o_ref):
    """AvgPool2d((2, 2)) on a row tile (with_conv=False path).

    x_ref: (1, tr, 2, Wo, 2*C) -- parity axis = top/bottom row of each 2x2 window;
           last axis packs [left-column C | right-column C].
    o_ref: (1, tr, Wo, C).
    """
    c = o_ref.shape[3]
    s = x_ref[0, :, 0, :, :] + x_ref[0, :, 1, :, :]              # (tr, Wo, 2*C)
    o_ref[0] = ((s[:, :, :c] + s[:, :, c:]) * 0.25).astype(o_ref.dtype)


# ------------------------------ tile choosers ------------------------------- #

def _choose_conv_row_tile(ho, wo, cin, cout, out_itemsize):
    """Pick tr | Ho: smallest tile reaching M = tr*Wo >= 256 that fits the VMEM
    budget (deep pipeline, full MXU M), else the largest fitting tile."""
    def est(tr):
        band = tr * 2 * (wo + 1) * 2 * cin * 2
        halo = (wo + 1) * 2 * cin * 2
        out = tr * wo * cout * out_itemsize
        patch = tr * wo * 9 * cin * 2
        return 2 * (band + halo + out) + patch          # in/out double-buffered
    divisors = [d for d in range(1, ho + 1) if ho % d == 0]
    valid = [d for d in divisors
             if (d == ho or (d * wo) % 8 == 0) and est(d) <= 8 * 1024 * 1024]
    if not valid:
        valid = [min(divisors, key=est)]
    for tr in valid:
        if tr * wo >= 256:
            return tr
    return valid[-1]


def _choose_pool_row_tile(ho, wo, c, itemsize):
    def est(tr):
        return 2 * (tr * 2 * wo * 2 * c + tr * wo * c) * itemsize
    divisors = [d for d in range(1, ho + 1) if ho % d == 0]
    valid = [d for d in divisors if est(d) <= 4 * 1024 * 1024] or [1]
    for tr in valid:
        if tr * wo >= 512:
            return tr
    return valid[-1]


# ------------------------------- wrappers ---------------------------------- #

def down_block_conv_nhwc(x_nhwc, weight, bias, out_dtype=jnp.float32, row_tile=None):
    """Conv2d(Cin, Cout, kernel=3, stride=2, padding=1) forward on NHWC input.

    out_dtype=jnp.bfloat16 halves store bytes (recommended on v5e when the consumer
    tolerates bf16 activations)."""
    n, h, w, cin = x_nhwc.shape
    cout = weight.shape[0]
    ho, wo = (h + 1) // 2, (w + 1) // 2
    hp, wp = 2 * ho + 2, 2 * wo + 2          # padded extents (even by construction)
    out_itemsize = jnp.dtype(out_dtype).itemsize

    # TODO(synk): fuse this pad + bf16 cast into the producing layer in a full
    # Encoder integration (it is one extra full-activation HBM round trip here).
    xp = jnp.pad(x_nhwc, ((0, 0), (1, hp - 1 - h), (1, wp - 1 - w), (0, 0)))
    xp = xp.astype(jnp.bfloat16)
    # Metadata-only view: split row parity, fold column parity into the channel axis.
    xv = xp.reshape(n, hp // 2, 2, wp // 2, 2 * cin)

    # weight (Cout, Cin, 3, 3) -> (kh, kw, Cin, Cout) -> (9*Cin, Cout) in the patch
    # K order: the three merged dx=0/1 tap pairs (2*Cin each) first, then the three
    # dx=2 taps (Cin each).
    wt = jnp.transpose(weight, (2, 3, 1, 0))                       # (3, 3, Cin, Cout)
    w_mat = jnp.concatenate(
        [wt[:, 0:2].reshape(3 * 2 * cin, cout), wt[:, 2].reshape(3 * cin, cout)],
        axis=0).astype(jnp.bfloat16)                                # (9*Cin, Cout)
    b_row = bias.reshape(1, cout).astype(jnp.float32)

    tr = row_tile if row_tile is not None else _choose_conv_row_tile(
        ho, wo, cin, cout, out_itemsize)
    assert ho % tr == 0 and (tr == ho or (tr * wo) % 8 == 0), (tr, ho, wo)
    grid = (n, ho // tr)

    est_step = (2 * (tr * 2 * (wo + 1) * 2 * cin * 2 + (wo + 1) * 2 * cin * 2
                     + tr * wo * cout * out_itemsize)
                + 2 * (9 * cin * cout * 2 + cout * 4)
                + tr * wo * 9 * cin * 2)
    vmem_limit = int(min(32 * 1024 * 1024,
                         max(16 * 1024 * 1024, 2 * est_step + (4 << 20))))

    flops = 2 * n * ho * wo * 9 * cin * cout
    bytes_accessed = int(xv.size * 2 + w_mat.size * 2 + b_row.size * 4
                         + n * ho * wo * cout * out_itemsize)

    out2d = pl.pallas_call(
        _conv3x3_s2_kernel,
        out_shape=jax.ShapeDtypeStruct((n, ho * wo, cout), out_dtype),
        grid=grid,
        in_specs=[
            # row-pair band [j*tr, (j+1)*tr) of the padded image (both parities)
            pl.BlockSpec((1, tr, 2, wo + 1, 2 * cin), lambda b, j: (b, j, 0, 0, 0)),
            # bottom halo: even row-pair (j+1)*tr (size-1 blocked dim -> element idx)
            pl.BlockSpec((1, 1, 1, wo + 1, 2 * cin),
                         lambda b, j: (b, (j + 1) * tr, 0, 0, 0)),
            pl.BlockSpec((9 * cin, cout), lambda b, j: (0, 0)),    # weights (resident)
            pl.BlockSpec((1, cout), lambda b, j: (0, 0)),          # bias    (resident)
        ],
        out_specs=pl.BlockSpec((1, tr * wo, cout), lambda b, j: (b, j, 0)),
        scratch_shapes=[pltpu.VMEM((tr, wo, 9 * cin), jnp.bfloat16)],
        compiler_params=pltpu.CompilerParams(
            dimension_semantics=("parallel", "parallel"),
            vmem_limit_bytes=vmem_limit),
        cost_estimate=pl.CostEstimate(flops=int(flops), transcendentals=0,
                                      bytes_accessed=bytes_accessed),
    )(xv, xv, w_mat, b_row)
    return out2d.reshape(n, ho, wo, cout)


def down_block_conv(x_nchw, weight, bias, out_dtype=jnp.float32, row_tile=None):
    """PyTorch-layout (NCHW) boundary.  A full-Encoder integration should keep NHWC
    between layers so these two transposes are paid once, not per layer."""
    x = jnp.transpose(x_nchw, (0, 2, 3, 1))
    y = down_block_conv_nhwc(x, weight, bias, out_dtype=out_dtype, row_tile=row_tile)
    return jnp.transpose(y, (0, 3, 1, 2))


def down_block_avgpool_nhwc(x_nhwc, row_tile=None):
    """AvgPool2d((2, 2)) forward on NHWC input (with_conv=False path)."""
    n, h, w, c = x_nhwc.shape
    ho, wo = h // 2, w // 2
    itemsize = jnp.dtype(x_nhwc.dtype).itemsize
    # Free (metadata-only) view; no rearranged copy in HBM.
    xv = x_nhwc[:, :2 * ho, :2 * wo, :].reshape(n, ho, 2, wo, 2 * c)

    tr = row_tile if row_tile is not None else _choose_pool_row_tile(ho, wo, c, itemsize)
    assert ho % tr == 0, (tr, ho)
    grid = (n, ho // tr)

    est_step = 2 * (tr * 2 * wo * 2 * c + tr * wo * c) * itemsize
    vmem_limit = int(min(32 * 1024 * 1024,
                         max(16 * 1024 * 1024, 2 * est_step + (4 << 20))))
    bytes_accessed = int((xv.size + n * ho * wo * c) * itemsize)

    out = pl.pallas_call(
        _avgpool2x2_kernel,
        out_shape=jax.ShapeDtypeStruct((n, ho, wo, c), x_nhwc.dtype),
        grid=grid,
        in_specs=[pl.BlockSpec((1, tr, 2, wo, 2 * c), lambda b, j: (b, j, 0, 0, 0))],
        out_specs=pl.BlockSpec((1, tr, wo, c), lambda b, j: (b, j, 0, 0)),
        compiler_params=pltpu.CompilerParams(
            dimension_semantics=("parallel", "parallel"),
            vmem_limit_bytes=vmem_limit),
        cost_estimate=pl.CostEstimate(flops=int(4 * n * ho * wo * c),
                                      transcendentals=0,
                                      bytes_accessed=bytes_accessed),
    )(xv)
    return out


def down_block_avgpool(x_nchw, row_tile=None):
    x = jnp.transpose(x_nchw, (0, 2, 3, 1))
    y = down_block_avgpool_nhwc(x, row_tile=row_tile)
    return jnp.transpose(y, (0, 3, 1, 2))


# ------------------------------ reference ---------------------------------- #

def _conv_reference(x_nchw, weight, bias):
    y = lax.conv_general_dilated(
        x_nchw.astype(jnp.float32), weight.astype(jnp.float32),
        window_strides=(2, 2), padding=((1, 1), (1, 1)),
        dimension_numbers=("NCHW", "OIHW", "NCHW"))
    return y + bias.reshape(1, -1, 1, 1)


# --------------------------------- main ------------------------------------ #

if __name__ == "__main__":
    key = jax.random.PRNGKey(0)
    k_x, k_w, k_b = jax.random.split(key, 3)

    N, C_in, C_out, H, W = 2, 4, 8, 16, 16
    x = jax.random.normal(k_x, (N, C_in, H, W), dtype=jnp.float32)

    # Deterministic Conv2d(in=4, out=8, k=3, s=2, p=1) parameters (PyTorch shapes).
    fan_in = C_in * 3 * 3
    bound = 1.0 / (fan_in ** 0.5)
    weight = jax.random.uniform(k_w, (C_out, C_in, 3, 3),
                                minval=-bound, maxval=bound, dtype=jnp.float32)
    bias = jax.random.uniform(k_b, (C_out,),
                              minval=-bound, maxval=bound, dtype=jnp.float32)

    y_ref = jax.block_until_ready(_conv_reference(x, weight, bias))

    # with_conv=True path (the module default): Conv2d(k=3, s=2, p=1).
    # Run once with the auto-chosen row tile (whole image here) and once with
    # row_tile=2 to exercise the multi-tile + halo path of the spatial grid axis.
    for rt in (None, 2):
        y = jax.block_until_ready(down_block_conv(x, weight, bias, row_tile=rt))
        assert y.shape == (N, C_out, H // 2, W // 2), y.shape
        max_err = float(jnp.max(jnp.abs(y - y_ref)))
        # bf16 inputs / f32 MXU accumulation: compare at bf16-level tolerance.
        assert jnp.allclose(y, y_ref, atol=2e-2, rtol=2e-2), (rt, max_err)

    # with_conv=False path: AvgPool2d((2, 2)).  Exact in f32.
    y_pool = jax.block_until_ready(down_block_avgpool(x))
    y_pool_ref = x.reshape(N, C_in, H // 2, 2, W // 2, 2).mean(axis=(3, 5))
    assert jnp.allclose(y_pool, y_pool_ref, atol=1e-6), "avgpool mismatch"

    print("KERNEL_OK")
</pallas_src>

<mosaic_0001>
module attributes {stable_mosaic.version = 11 : i64} {
  func.func @_conv3x3_s2_kernel(%arg0: i32, %arg1: i32, %arg2: memref<1x8x2x9x8xbf16, #tpu.memory_space<vmem>>, %arg3: memref<1x1x1x9x8xbf16, #tpu.memory_space<vmem>>, %arg4: memref<36x8xbf16, #tpu.memory_space<vmem>>, %arg5: memref<1x8xf32, #tpu.memory_space<vmem>>, %arg6: memref<1x64x8xf32, #tpu.memory_space<vmem>>, %arg7: memref<8x8x36xbf16, #tpu.memory_space<vmem>>) attributes {dimension_semantics = [#tpu.dimension_semantics<parallel>, #tpu.dimension_semantics<parallel>], iteration_bounds = array<i64: 2, 1>, scalar_prefetch = 0 : i64, scratch_operands = 1 : i64, tpu.core_type = #tpu.core_type<tc>, window_params = [{transform_indices = @transform_0, window_bounds = array<i64: 1, 8, 2, 9, 8>}, {transform_indices = @transform_1, window_bounds = array<i64: 1, 1, 1, 9, 8>}, {pipeline_mode = #tpu.pipeline_mode<synchronous>, transform_indices = @transform_2, window_bounds = array<i64: 36, 8>}, {pipeline_mode = #tpu.pipeline_mode<synchronous>, transform_indices = @transform_3, window_bounds = array<i64: 1, 8>}, {transform_indices = @transform_4, window_bounds = array<i64: 1, 64, 8>}]} {
    %c0 = arith.constant 0 : index
    %c0_0 = arith.constant 0 : index
    %c0_1 = arith.constant 0 : index
    %c0_2 = arith.constant 0 : index
    %c0_3 = arith.constant 0 : index
    %0 = vector.load %arg2[%c0, %c0_0, %c0_1, %c0_2, %c0_3] : memref<1x8x2x9x8xbf16, #tpu.memory_space<vmem>>, vector<1x8x1x8x8xbf16>
    %1 = vector.shape_cast %0 : vector<1x8x1x8x8xbf16> to vector<8x8x8xbf16>
    %c0_4 = arith.constant 0 : index
    %c0_5 = arith.constant 0 : index
    %c0_6 = arith.constant 0 : index
    %2 = vector.load %arg7[%c0_4, %c0_5, %c0_6] : memref<8x8x36xbf16, #tpu.memory_space<vmem>>, vector<8x8x8xbf16>
    tpu.vector_store %arg7[%c0_4, %c0_5, %c0_6], %1 {strides = array<i32>} : memref<8x8x36xbf16, #tpu.memory_space<vmem>>, vector<8x8x8xbf16>,
    %c0_7 = arith.constant 0 : index
    %c0_8 = arith.constant 0 : index
    %c0_9 = arith.constant 0 : index
    %c1 = arith.constant 1 : index
    %c0_10 = arith.constant 0 : index
    %3 = vector.load %arg2[%c0_7, %c0_8, %c0_9, %c1, %c0_10] : memref<1x8x2x9x8xbf16, #tpu.memory_space<vmem>>, vector<1x8x1x8x4xbf16>
    %4 = vector.shape_cast %3 : vector<1x8x1x8x4xbf16> to vector<8x8x4xbf16>
    %c0_11 = arith.constant 0 : index
    %c0_12 = arith.constant 0 : index
    %c24 = arith.constant 24 : index
    %5 = vector.load %arg7[%c0_11, %c0_12, %c24] : memref<8x8x36xbf16, #tpu.memory_space<vmem>>, vector<8x8x4xbf16>
    tpu.vector_store %arg7[%c0_11, %c0_12, %c24], %4 {strides = array<i32>} : memref<8x8x36xbf16, #tpu.memory_space<vmem>>, vector<8x8x4xbf16>,
    %c0_13 = arith.constant 0 : index
    %c0_14 = arith.constant 0 : index
    %c1_15 = arith.constant 1 : index
    %c0_16 = arith.constant 0 : index
    %c0_17 = arith.constant 0 : index
    %6 = vector.load %arg2[%c0_13, %c0_14, %c1_15, %c0_16, %c0_17] : memref<1x8x2x9x8xbf16, #tpu.memory_space<vmem>>, vector<1x8x1x8x8xbf16>
    %7 = vector.shape_cast %6 : vector<1x8x1x8x8xbf16> to vector<8x8x8xbf16>
    %c0_18 = arith.constant 0 : index
    %c0_19 = arith.constant 0 : index
    %c8 = arith.constant 8 : index
    %8 = vector.load %arg7[%c0_18, %c0_19, %c8] : memref<8x8x36xbf16, #tpu.memory_space<vmem>>, vector<8x8x8xbf16>
    tpu.vector_store %arg7[%c0_18, %c0_19, %c8], %7 {strides = array<i32>} : memref<8x8x36xbf16, #tpu.memory_space<vmem>>, vector<8x8x8xbf16>,
    %c0_20 = arith.constant 0 : index
    %c0_21 = arith.constant 0 : index
    %c1_22 = arith.constant 1 : index
    %c1_23 = arith.constant 1 : index
    %c0_24 = arith.constant 0 : index
    %9 = vector.load %arg2[%c0_20, %c0_21, %c1_22, %c1_23, %c0_24] : memref<1x8x2x9x8xbf16, #tpu.memory_space<vmem>>, vector<1x8x1x8x4xbf16>
    %10 = vector.shape_cast %9 : vector<1x8x1x8x4xbf16> to vector<8x8x4xbf16>
    %c0_25 = arith.constant 0 : index
    %c0_26 = arith.constant 0 : index
    %c28 = arith.constant 28 : index
    %11 = vector.load %arg7[%c0_25, %c0_26, %c28] : memref<8x8x36xbf16, #tpu.memory_space<vmem>>, vector<8x8x4xbf16>
    tpu.vector_store %arg7[%c0_25, %c0_26, %c28], %10 {strides = array<i32>} : memref<8x8x36xbf16, #tpu.memory_space<vmem>>, vector<8x8x4xbf16>,
    %c0_27 = arith.constant 0 : index
    %c1_28 = arith.constant 1 : index
    %c0_29 = arith.constant 0 : index
    %c0_30 = arith.constant 0 : index
    %c0_31 = arith.constant 0 : index
    %12 = vector.load %arg2[%c0_27, %c1_28, %c0_29, %c0_30, %c0_31] : memref<1x8x2x9x8xbf16, #tpu.memory_space<vmem>>, vector<1x7x1x8x8xbf16>
    %13 = vector.shape_cast %12 : vector<1x7x1x8x8xbf16> to vector<7x8x8xbf16>
    %c0_32 = arith.constant 0 : index
    %c0_33 = arith.constant 0 : index
    %c16 = arith.constant 16 : index
    %14 = vector.load %arg7[%c0_32, %c0_33, %c16] : memref<8x8x36xbf16, #tpu.memory_space<vmem>>, vector<7x8x8xbf16>
    tpu.vector_store %arg7[%c0_32, %c0_33, %c16], %13 {strides = array<i32>} : memref<8x8x36xbf16, #tpu.memory_space<vmem>>, vector<7x8x8xbf16>,
    %c0_34 = arith.constant 0 : index
    %c1_35 = arith.constant 1 : index
    %c0_36 = arith.constant 0 : index
    %c1_37 = arith.constant 1 : index
    %c0_38 = arith.constant 0 : index
    %15 = vector.load %arg2[%c0_34, %c1_35, %c0_36, %c1_37, %c0_38] : memref<1x8x2x9x8xbf16, #tpu.memory_space<vmem>>, vector<1x7x1x8x4xbf16>
    %16 = vector.shape_cast %15 : vector<1x7x1x8x4xbf16> to vector<7x8x4xbf16>
    %c0_39 = arith.constant 0 : index
    %c0_40 = arith.constant 0 : index
    %c32 = arith.constant 32 : index
    %17 = vector.load %arg7[%c0_39, %c0_40, %c32] : memref<8x8x36xbf16, #tpu.memory_space<vmem>>, vector<7x8x4xbf16>
    tpu.vector_store %arg7[%c0_39, %c0_40, %c32], %16 {strides = array<i32>} : memref<8x8x36xbf16, #tpu.memory_space<vmem>>, vector<7x8x4xbf16>,
    %c0_41 = arith.constant 0 : index
    %c0_42 = arith.constant 0 : index
    %c0_43 = arith.constant 0 : index
    %c0_44 = arith.constant 0 : index
    %c0_45 = arith.constant 0 : index
    %18 = vector.load %arg3[%c0_41, %c0_42, %c0_43, %c0_44, %c0_45] : memref<1x1x1x9x8xbf16, #tpu.memory_space<vmem>>, vector<1x1x1x8x8xbf16>
    %19 = vector.shape_cast %18 : vector<1x1x1x8x8xbf16> to vector<1x8x8xbf16>
    %c7 = arith.constant 7 : index
    %c0_46 = arith.constant 0 : index
    %c16_47 = arith.constant 16 : index
    %20 = vector.load %arg7[%c7, %c0_46, %c16_47] : memref<8x8x36xbf16, #tpu.memory_space<vmem>>, vector<1x8x8xbf16>
    tpu.vector_store %arg7[%c7, %c0_46, %c16_47], %19 {strides = array<i32>} : memref<8x8x36xbf16, #tpu.memory_space<vmem>>, vector<1x8x8xbf16>,
    %c0_48 = arith.constant 0 : index
    %c0_49 = arith.constant 0 : index
    %c0_50 = arith.constant 0 : index
    %c1_51 = arith.constant 1 : index
    %c0_52 = arith.constant 0 : index
    %21 = vector.load %arg3[%c0_48, %c0_49, %c0_50, %c1_51, %c0_52] : memref<1x1x1x9x8xbf16, #tpu.memory_space<vmem>>, vector<1x1x1x8x4xbf16>
    %22 = vector.shape_cast %21 : vector<1x1x1x8x4xbf16> to vector<1x8x4xbf16>
    %c7_53 = arith.constant 7 : index
    %c0_54 = arith.constant 0 : index
    %c32_55 = arith.constant 32 : index
    %23 = vector.load %arg7[%c7_53, %c0_54, %c32_55] : memref<8x8x36xbf16, #tpu.memory_space<vmem>>, vector<1x8x4xbf16>
    tpu.vector_store %arg7[%c7_53, %c0_54, %c32_55], %22 {strides = array<i32>} : memref<8x8x36xbf16, #tpu.memory_space<vmem>>, vector<1x8x4xbf16>,
    %c0_56 = arith.constant 0 : index
    %c0_57 = arith.constant 0 : index
    %c0_58 = arith.constant 0 : index
    %24 = vector.load %arg7[%c0_56, %c0_57, %c0_58] : memref<8x8x36xbf16, #tpu.memory_space<vmem>>, vector<8x8x36xbf16>
    %25 = vector.shape_cast %24 : vector<8x8x36xbf16> to vector<64x36xbf16>
    %c0_59 = arith.constant 0 : index
    %c0_60 = arith.constant 0 : index
    %26 = vector.load %arg4[%c0_59, %c0_60] : memref<36x8xbf16, #tpu.memory_space<vmem>>, vector<36x8xbf16>
    %cst = arith.constant dense<0.000000e+00> : vector<64x8xf32>
    %27 = tpu.matmul %25, %26, %cst {dimension_numbers = #tpu.dot_dimension_numbers<[1], [0], [0], [1], [0, 0, 1, 1], [], []>} : vector<64x36xbf16>, vector<36x8xbf16>, vector<64x8xf32> -> vector<64x8xf32>
    %c0_61 = arith.constant 0 : index
    %c0_62 = arith.constant 0 : index
    %28 = vector.load %arg5[%c0_61, %c0_62] : memref<1x8xf32, #tpu.memory_space<vmem>>, vector<1x8xf32>
    %29 = vector.broadcast %28 : vector<1x8xf32> to vector<64x8xf32>
    %30 = arith.addf %27, %29 : vector<64x8xf32>
    %c0_63 = arith.constant 0 : index
    %c0_64 = arith.constant 0 : index
    %c0_65 = arith.constant 0 : index
    %31 = vector.load %arg6[%c0_63, %c0_64, %c0_65] : memref<1x64x8xf32, #tpu.memory_space<vmem>>, vector<1x64x8xf32>
    %32 = vector.shape_cast %31 : vector<1x64x8xf32> to vector<64x8xf32>
    %33 = vector.shape_cast %30 : vector<64x8xf32> to vector<1x64x8xf32>
    tpu.vector_store %arg6[%c0_63, %c0_64, %c0_65], %33 {strides = array<i32>} : memref<1x64x8xf32, #tpu.memory_space<vmem>>, vector<1x64x8xf32>,
    return
  }
  func.func @transform_0(%arg0: i32, %arg1: i32) -> (i32, i32, i32, i32, i32) {
    %c0_i32 = arith.constant 0 : i32
    %c0_i32_0 = arith.constant 0 : i32
    %c0_i32_1 = arith.constant 0 : i32
    %c0_i32_2 = arith.constant 0 : i32
    return %arg0, %arg1, %c0_i32, %c0_i32_0, %c0_i32_1 : i32, i32, i32, i32, i32
  }
  func.func @transform_1(%arg0: i32, %arg1: i32) -> (i32, i32, i32, i32, i32) {
    %c1_i32 = arith.constant 1 : i32
    %0 = arith.addi %arg1, %c1_i32 : i32
    %c8_i32 = arith.constant 8 : i32
    %1 = arith.muli %0, %c8_i32 : i32
    %c0_i32 = arith.constant 0 : i32
    %c0_i32_0 = arith.constant 0 : i32
    %c0_i32_1 = arith.constant 0 : i32
    %c0_i32_2 = arith.constant 0 : i32
    return %arg0, %1, %c0_i32, %c0_i32_0, %c0_i32_1 : i32, i32, i32, i32, i32
  }
  func.func @transform_2(%arg0: i32, %arg1: i32) -> (i32, i32) {
    %c0_i32 = arith.constant 0 : i32
    %c0_i32_0 = arith.constant 0 : i32
    %c0_i32_1 = arith.constant 0 : i32
    return %c0_i32, %c0_i32_0 : i32, i32
  }
  func.func @transform_3(%arg0: i32, %arg1: i32) -> (i32, i32) {
    %c0_i32 = arith.constant 0 : i32
    %c0_i32_0 = arith.constant 0 : i32
    %c0_i32_1 = arith.constant 0 : i32
    return %c0_i32, %c0_i32_0 : i32, i32
  }
  func.func @transform_4(%arg0: i32, %arg1: i32) -> (i32, i32, i32) {
    %c0_i32 = arith.constant 0 : i32
    %c0_i32_0 = arith.constant 0 : i32
    return %arg0, %arg1, %c0_i32 : i32, i32, i32
  }
}

</mosaic_0001>

<llo_original>
// kernel: tpu_custom_call.1
$region0: #{tpu_custom_call.1}
  #allocation0 [shape = 'u32[]', space=smem, size = 0x4, offset = 0x4, fixed_abs, tag = 'smem constant byte address 0x4 - core index']
  #allocation1 [shape = 'u32[144,128]{1,0:T(1,128)}', space=vmem, size = 0x12000, scoped, tag = 'internal scratch']
  #allocation2 [shape = 'bf16[8,8,36]{2,1,0:T(8,128)(2,1)}', space=vmem, size = 0x4000, scoped, tag = 'scratch operand']
  %s0 = inlined_call_operand.vmem [shape: bf16[2,9,2,9,8], index: 0, kind: input, shape index: {}]
  %s1 = inlined_call_operand.vmem [shape: bf16[2,9,2,9,8], index: 1, kind: input, shape index: {}]
  %s2 = inlined_call_operand.vmem [shape: bf16[36,8], index: 2, kind: input, shape index: {}]
  %s3 = inlined_call_operand.vmem [shape: f32[1,8], index: 3, kind: input, shape index: {}]
  %s4 = inlined_call_operand.vmem [shape: f32[2,64,8], index: 4, kind: output, shape index: {}]
  %s5 = sld [smem:[#allocation0]]
  $region49: #{tpu_custom_call.1} parent=0
    _
  %s7 = ssub.s32 1, %s5
  %s8 = scalar_select 0, %s7, %s5
  loop: start=0, step=1, limit=4
  $region2: #{tpu_custom_call.1} parent=0 // loop_pre_header
    _
  $region3: #{tpu_custom_call.1} parent=0 // loop_header
    %s10 = sphi 0, %s14
    %p11 = scmp.ge.s32.totalorder %s10, 4
    %s17 = sphi 0, %s29
    %s18 = sphi 0, %s25
    %s19 = sphi 0, %s17
    %s20 = sphi 0, %s18
    %s21 = sphi 0, %s19
    %s22 = sphi 0, %s20
    %s34 = sphi 0, %s36
    %s37 = sphi 0, %s34
    %s38 = sphi 0, %s37
    %s54 = sphi 0, %s38
    %s66 = sphi 0, %s68
    %s69 = sphi 0, %s66
    %s70 = sphi 0, %s69
    %s86 = sphi 0, %s70
    %s90 = sphi 0, %s90
    %s92 = sphi 0, %s90
    %s93 = sphi 0, %s92
    %s107 = sphi 0, %s93
    %s111 = sphi 0, %s111
    %s113 = sphi 0, %s111
    %s114 = sphi 0, %s113
    %s128 = sphi 0, %s114
    %s136 = sphi 0, %s138
    %s139 = sphi 0, %s136
    %s140 = sphi 0, %s139
    %s156 = sphi 0, %s140
  $region4: #{tpu_custom_call.1} parent=0 // loop_header_branch
    %13 = sbr.rel (%p11) target = $region8
  $region5: #{tpu_custom_call.1} parent=0 // loop_body
    %s15 = ssub.s32 %s10, 1
    %s16 = ssub.s32 %s10, 2
    %s23 = sadd.s32 1, %s18
    %p24 = scmp.ge.s32.totalorder %s23, 1
    %s25 = scalar_select %p24, 0, %s23
    %s26 = sadd.s32 1, %s17
    %s27 = scalar_select %p24, %s26, %s17
    %p28 = scmp.ge.s32.totalorder %s27, 2
    %s29 = scalar_select %p28, 0, %s27
    %s30 = ssub.s32 %s17, %s29
    %s31 = ssub.s32 %s18, %s25
    %s32 = sor.u32 %s30, %s31
    %p33 = scmp.eq.s32.totalorder %s32, 0
    %s35 = sadd.s32 %s34, 1
    %s36 = scalar_select %p33, %s34, %s35
    %p39 = pneg %p33
    %p40 = scmp.eq.s32.totalorder %s10, 1
    %p41 = por %p39, %p40
    %p42 = scmp.ne.s32.totalorder %s34, %s37
    %p43 = scmp.eq.s32.totalorder %s10, 0
    %p44 = por %p42, %p43
    %p45 = scmp.ne.s32.totalorder %s34, %s37
    %p46 = scmp.eq.s32.totalorder %s15, 1
    %p47 = por %p45, %p46
    %p48 = scmp.ne.s32.totalorder %s37, %s38
    %p49 = scmp.eq.s32.totalorder %s15, 0
    %p50 = por %p48, %p49
    %p51 = scmp.ne.s32.totalorder %s37, %s38
    %p52 = scmp.eq.s32.totalorder %s16, 1
    %p53 = por %p51, %p52
    %p55 = scmp.ne.s32.totalorder %s38, %s54
    %p56 = scmp.eq.s32.totalorder %s16, 0
    %p57 = por %p55, %p56
    %s58 = sadd.s32 %s18, 1
    %s59 = smul.u32 %s58, 8
    %s60 = sadd.s32 %s25, 1
    %s61 = smul.u32 %s60, 8
    %s62 = ssub.s32 %s17, %s29
    %s63 = ssub.s32 %s59, %s61
    %s64 = sor.u32 %s62, %s63
    %p65 = scmp.eq.s32.totalorder %s64, 0
    %s67 = sadd.s32 %s66, 1
    %s68 = scalar_select %p65, %s66, %s67
    %p71 = pneg %p65
    %p72 = scmp.eq.s32.totalorder %s10, 1
    %p73 = por %p71, %p72
    %p74 = scmp.ne.s32.totalorder %s66, %s69
    %p75 = scmp.eq.s32.totalorder %s10, 0
    %p76 = por %p74, %p75
    %p77 = scmp.ne.s32.totalorder %s66, %s69
    %p78 = scmp.eq.s32.totalorder %s15, 1
    %p79 = por %p77, %p78
    %p80 = scmp.ne.s32.totalorder %s69, %s70
    %p81 = scmp.eq.s32.totalorder %s15, 0
    %p82 = por %p80, %p81
    %p83 = scmp.ne.s32.totalorder %s69, %s70
    %p84 = scmp.eq.s32.totalorder %s16, 1
    %p85 = por %p83, %p84
    %p87 = scmp.ne.s32.totalorder %s70, %s86
    %p88 = scmp.eq.s32.totalorder %s16, 0
    %p89 = por %p87, %p88
    %s91 = sadd.s32 %s90, 1
    %p94 = scmp.eq.s32.totalorder %s10, 1
    %p95 = scmp.ne.s32.totalorder %s90, %s92
    %p96 = scmp.eq.s32.totalorder %s10, 0
    %p97 = por %p95, %p96
    %p98 = scmp.ne.s32.totalorder %s90, %s92
    %p99 = scmp.eq.s32.totalorder %s15, 1
    %p100 = por %p98, %p99
    %p101 = scmp.ne.s32.totalorder %s92, %s93
    %p102 = scmp.eq.s32.totalorder %s15, 0
    %p103 = por %p101, %p102
    %p104 = scmp.ne.s32.totalorder %s92, %s93
    %p105 = scmp.eq.s32.totalorder %s16, 1
    %p106 = por %p104, %p105
    %p108 = scmp.ne.s32.totalorder %s93, %s107
    %p109 = scmp.eq.s32.totalorder %s16, 0
    %p110 = por %p108, %p109
    %s112 = sadd.s32 %s111, 1
    %p115 = scmp.eq.s32.totalorder %s10, 1
    %p116 = scmp.ne.s32.totalorder %s111, %s113
    %p117 = scmp.eq.s32.totalorder %s10, 0
    %p118 = por %p116, %p117
    %p119 = scmp.ne.s32.totalorder %s111, %s113
    %p120 = scmp.eq.s32.totalorder %s15, 1
    %p121 = por %p119, %p120
    %p122 = scmp.ne.s32.totalorder %s113, %s114
    %p123 = scmp.eq.s32.totalorder %s15, 0
    %p124 = por %p122, %p123
    %p125 = scmp.ne.s32.totalorder %s113, %s114
    %p126 = scmp.eq.s32.totalorder %s16, 1
    %p127 = por %p125, %p126
    %p129 = scmp.ne.s32.totalorder %s114, %s128
    %p130 = scmp.eq.s32.totalorder %s16, 0
    %p131 = por %p129, %p130
    %s132 = ssub.s32 %s17, %s29
    %s133 = ssub.s32 %s18, %s25
    %s134 = sor.u32 %s132, %s133
    %p135 = scmp.eq.s32.totalorder %s134, 0
    %s137 = sadd.s32 %s136, 1
    %s138 = scalar_select %p135, %s136, %s137
    %p141 = pneg %p135
    %p142 = scmp.eq.s32.totalorder %s10, 1
    %p143 = por %p141, %p142
    %p144 = scmp.ne.s32.totalorder %s136, %s139
    %p145 = scmp.eq.s32.totalorder %s10, 0
    %p146 = por %p144, %p145
    %p147 = scmp.ne.s32.totalorder %s136, %s139
    %p148 = scmp.eq.s32.totalorder %s15, 1
    %p149 = por %p147, %p148
    %p150 = scmp.ne.s32.totalorder %s139, %s140
    %p151 = scmp.eq.s32.totalorder %s15, 0
    %p152 = por %p150, %p151
    %p153 = scmp.ne.s32.totalorder %s139, %s140
    %p154 = scmp.eq.s32.totalorder %s16, 1
    %p155 = por %p153, %p154
    %p157 = scmp.ne.s32.totalorder %s140, %s156
    %p158 = scmp.eq.s32.totalorder %s16, 0
    %p159 = por %p157, %p158
    %p160 = scmp.le.s32.totalorder 1, %s10
    %p161 = scmp.lt.s32.totalorder %s10, 3
    %p162 = pnand %p160, %p161
    %p163 = pneg %p162
    // Predicated region
    $region9: #{tpu_custom_call.1} parent=5 // pred_check
      _
    $region10: #{tpu_custom_call.1} parent=5 // pred_check_branch
      %165 = sbr.rel (%p162) target = $region12
    $region11: #{tpu_custom_call.1} parent=5 // pred_region
      %s166 = ssub.s32 %s10, 1
      // Predicated region
      $region13: #{tpu_custom_call.1} parent=11 // pred_check
        %p167 = pneg %p103
      $region14: #{tpu_custom_call.1} parent=11 // pred_check_branch
        %169 = sbr.rel (%p167) target = $region16
      $region15: #{tpu_custom_call.1} parent=11 // pred_region
        _
      $region16: #{tpu_custom_call.1} parent=11 // pred_fallthru
        _
      // Predicated region
      $region17: #{tpu_custom_call.1} parent=11 // pred_check
        %p170 = pneg %p124
      $region18: #{tpu_custom_call.1} parent=11 // pred_check_branch
        %172 = sbr.rel (%p170) target = $region20
      $region19: #{tpu_custom_call.1} parent=11 // pred_region
        _
      $region20: #{tpu_custom_call.1} parent=11 // pred_fallthru
        _
    $region12: #{tpu_custom_call.1} parent=5 // pred_fallthru
      _
    %p173 = scmp.lt.s32.totalorder %s10, 2
    // Predicated region
    $region21: #{tpu_custom_call.1} parent=5 // pred_check
      %p174 = pneg %p173
    $region22: #{tpu_custom_call.1} parent=5 // pred_check_branch
      %176 = sbr.rel (%p174) target = $region24
    $region23: #{tpu_custom_call.1} parent=5 // pred_region
      // Predicated region
      $region25: #{tpu_custom_call.1} parent=23 // pred_check
        %p177 = pneg %p44
      $region26: #{tpu_custom_call.1} parent=23 // pred_check_branch
        %179 = sbr.rel (%p177) target = $region28
      $region27: #{tpu_custom_call.1} parent=23 // pred_region
        %s180 = smul.u32 8, %s18
        %s181 = ssub.s32 9, %s180
        %p182 = scmp.lt.s32.totalorder %s181, 8
        %s183 = scalar_select %p182, %s181, 8
        %s184 = smul.u32 64, %s183
        %s185 = smul.u32 %s184, 2
        %s186 = smul.u32 %s185, 2
        %p187 = scmp.lt.s32.totalorder %s17, 1
        %s188 = scalar_select %p187, %s17, 1
        %p189 = scmp.lt.s32.totalorder %s180, 8
        %s190 = scalar_select %p189, %s180, 8
        %s191 = smul.addr %s190, 4
        %s192 = smul.addr %s188, 36
        %s193 = sadd.s32 %s191, %s192
        %s194 = smul.addr %s193, 4
        %s195 = scalar_lea.vmem %s0, %s194
        %s196 = smul.u32 8, %s18
        %s197 = ssub.s32 9, %s196
        %p198 = scmp.lt.s32.totalorder %s197, 8
        %s199 = scalar_select %p198, %s197, 8
        %s200 = smul.u32 64, %s199
        %s201 = smul.u32 %s200, 2
        %s202 = smul.u32 %s201, 2
      $region28: #{tpu_custom_call.1} parent=23 // pred_fallthru
        _
      // Predicated region
      $region29: #{tpu_custom_call.1} parent=23 // pred_check
        %p203 = pneg %p76
      $region30: #{tpu_custom_call.1} parent=23 // pred_check_branch
        %205 = sbr.rel (%p203) target = $region32
      $region31: #{tpu_custom_call.1} parent=23 // pred_region
        %s206 = sadd.s32 %s18, 1
        %s207 = smul.u32 %s206, 8
        %p208 = scmp.lt.s32.totalorder %s17, 1
        %s209 = scalar_select %p208, %s17, 1
        %p210 = scmp.lt.s32.totalorder %s207, 8
        %s211 = scalar_select %p210, %s207, 8
        %s212 = smul.addr %s211, 4
        %s213 = smul.addr %s209, 36
        %s214 = sadd.s32 %s212, %s213
        %s215 = smul.addr %s214, 4
        %s216 = scalar_lea.vmem %s1, %s215
        %s217 = sadd.s32 %s18, 1
        %s218 = smul.u32 %s217, 8
      $region32: #{tpu_custom_call.1} parent=23 // pred_fallthru
        _
    $region24: #{tpu_custom_call.1} parent=5 // pred_fallthru
      _
    %p219 = scmp.le.s32.totalorder 1, %s10
    %p220 = scmp.lt.s32.totalorder %s10, 3
    %p221 = pnand %p219, %p220
    %p222 = pneg %p221
    // Predicated region
    $region33: #{tpu_custom_call.1} parent=5 // pred_check
      _
    $region34: #{tpu_custom_call.1} parent=5 // pred_check_branch
      %224 = sbr.rel (%p221) target = $region36
    $region35: #{tpu_custom_call.1} parent=5 // pred_region
      %s225 = ssub.s32 %s10, 1
      %s226 = smul.u32 8, %s20
      %s227 = ssub.s32 9, %s226
      %p228 = scmp.lt.s32.totalorder %s227, 8
      %s229 = scalar_select %p228, %s227, 8
      %s230 = smul.u32 64, %s229
      %s231 = smul.u32 %s230, 2
      %s232 = smul.u32 %s231, 2
      %p233 = scmp.lt.s32.totalorder %s19, 1
      %s234 = scalar_select %p233, %s19, 1
      %p235 = scmp.lt.s32.totalorder %s226, 8
      %s236 = scalar_select %p235, %s226, 8
      %s237 = smul.addr %s236, 4
      %s238 = smul.addr %s234, 36
      %s239 = sadd.s32 %s237, %s238
      %s240 = smul.addr %s239, 4
      %s241 = scalar_lea.vmem %s0, %s240
      %p242 = pneg %p50
      %p243 = pneg %p47
      %s244 = sadd.s32 %s20, 1
      %s245 = smul.u32 %s244, 8
      %p246 = scmp.lt.s32.totalorder %s19, 1
      %s247 = scalar_select %p246, %s19, 1
      %p248 = scmp.lt.s32.totalorder %s245, 8
      %s249 = scalar_select %p248, %s245, 8
      %s250 = smul.addr %s249, 4
      %s251 = smul.addr %s247, 36
      %s252 = sadd.s32 %s250, %s251
      %s253 = smul.addr %s252, 4
      %s254 = scalar_lea.vmem %s1, %s253
      %p255 = pneg %p82
      %p256 = pneg %p79
      %p257 = pneg %p103
      %p258 = pneg %p100
      %p259 = pneg %p124
      %p260 = pneg %p121
      %p261 = pneg %p152
      %p262 = pneg %p149
      %s263 = smul.u32 8, %s20
      %p264 = scmp.lt.s32.totalorder %s19, 1
      %s265 = scalar_select %p264, %s19, 1
      %p266 = scmp.lt.s32.totalorder %s263, 7
      %s267 = scalar_select %p266, %s263, 7
      %s268 = smul.addr %s265, 8
      %s269 = sadd.s32 %s267, %s268
      %s270 = smul.addr %s269, 8
      %s271 = scalar_lea.vmem %s4, %s270
      %s272 = smul.u32 8, %s20
      %s273 = ssub.s32 9, %s272
      %p274 = scmp.lt.s32.totalorder %s273, 8
      %s275 = scalar_select %p274, %s273, 8
      %s276 = smul.u32 64, %s275
      %s277 = smul.u32 %s276, 2
      %s278 = smul.u32 %s277, 2
      %p279 = scmp.lt.s32.totalorder %s19, 1
      %s280 = scalar_select %p279, %s19, 1
      %p281 = scmp.lt.s32.totalorder %s272, 8
      %s282 = scalar_select %p281, %s272, 8
      %s283 = smul.addr %s282, 4
      %s284 = smul.addr %s280, 36
      %s285 = sadd.s32 %s283, %s284
      %s286 = smul.addr %s285, 4
      %s287 = scalar_lea.vmem %s0, %s286
      %s288 = smul.u32 8, %s20
      %s289 = ssub.s32 9, %s288
      %p290 = scmp.lt.s32.totalorder %s289, 8
      %s291 = scalar_select %p290, %s289, 8
      %s292 = smul.u32 64, %s291
      %s293 = smul.u32 %s292, 2
      %s294 = smul.u32 %s293, 2
      %s295 = sadd.s32 %s20, 1
      %s296 = smul.u32 %s295, 8
      %p297 = scmp.lt.s32.totalorder %s19, 1
      %s298 = scalar_select %p297, %s19, 1
      %p299 = scmp.lt.s32.totalorder %s296, 8
      %s300 = scalar_select %p299, %s296, 8
      %s301 = smul.addr %s300, 4
      %s302 = smul.addr %s298, 36
      %s303 = sadd.s32 %s301, %s302
      %s304 = smul.addr %s303, 4
      %s305 = scalar_lea.vmem %s1, %s304
      %s306 = sadd.s32 %s20, 1
      %s307 = smul.u32 %s306, 8
      %s308 = smul.u32 8, %s20
      %p309 = scmp.lt.s32.totalorder %s19, 1
      %s310 = scalar_select %p309, %s19, 1
      %p311 = scmp.lt.s32.totalorder %s308, 7
      %s312 = scalar_select %p311, %s308, 7
      %s313 = smul.addr %s310, 8
      %s314 = sadd.s32 %s312, %s313
      %s315 = smul.addr %s314, 8
      %s316 = scalar_lea.vmem %s4, %s315
      %s317 = smul.u32 8, %s20
      %v319 = vld [vmem:[%s287] sm:$0xf]
      %v320 = vld [vmem:[%s287 + $0x10] sm:$0xf]
      %v321 = vld [vmem:[%s287 + $0x20] sm:$0xf]
      %v322 = vld [vmem:[%s287 + $0x30] sm:$0xf]
      %v323 = vld [vmem:[%s287 + $0x40] sm:$0xf]
      %v324 = vld [vmem:[%s287 + $0x50] sm:$0xf]
      %v325 = vld [vmem:[%s287 + $0x60] sm:$0xf]
      %v326 = vld [vmem:[%s287 + $0x70] sm:$0xf]
      %vm327 = vcmask 60416
      %328 = vst.msk [vmem:[#allocation2] sm:$0xf] %vm327, %v319
      %329 = vst.msk [vmem:[#allocation2 + $0x4] sm:$0xf] %vm327, %v320
      %330 = vst.msk [vmem:[#allocation2 + $0x8] sm:$0xf] %vm327, %v321
      %331 = vst.msk [vmem:[#allocation2 + $0xc] sm:$0xf] %vm327, %v322
      %332 = vst.msk [vmem:[#allocation2 + $0x10] sm:$0xf] %vm327, %v323
      %333 = vst.msk [vmem:[#allocation2 + $0x14] sm:$0xf] %vm327, %v324
      %334 = vst.msk [vmem:[#allocation2 + $0x18] sm:$0xf] %vm327, %v325
      %335 = vst.msk [vmem:[#allocation2 + $0x1c] sm:$0xf] %vm327, %v326
      %v336 = vld [vmem:[%s287] sm:$0xf]
      %v337 = vld [vmem:[%s287 + $0x4] sm:$0x1]
      %v338 = vld [vmem:[%s287 + $0x10] sm:$0xf]
      %v339 = vld [vmem:[%s287 + $0x14] sm:$0x1]
      %v340 = vld [vmem:[%s287 + $0x20] sm:$0xf]
      %v341 = vld [vmem:[%s287 + $0x24] sm:$0x1]
      %v342 = vld [vmem:[%s287 + $0x30] sm:$0xf]
      %v343 = vld [vmem:[%s287 + $0x34] sm:$0x1]
      %v344 = vld [vmem:[%s287 + $0x40] sm:$0xf]
      %v345 = vld [vmem:[%s287 + $0x44] sm:$0x1]
      %v346 = vld [vmem:[%s287 + $0x50] sm:$0xf]
      %v347 = vld [vmem:[%s287 + $0x54] sm:$0x1]
      %v348 = vld [vmem:[%s287 + $0x60] sm:$0xf]
      %v349 = vld [vmem:[%s287 + $0x64] sm:$0x1]
      %v350 = vld [vmem:[%s287 + $0x70] sm:$0xf]
      %v351 = vld [vmem:[%s287 + $0x74] sm:$0x1]
      %vm352 = vsmask.f32 3328
      %vm353 = vsmask.f32 7440
      %vm354 = vmor %vm352, %vm353
      %v356 = vshrl.u32 %v336, 16
      %v358 = vrot.slane %v356, 4
      %v359 = vshll.u32 %v336, 16
      %v361 = vrot.slane %v359, 5
      %v362 = vor.u32 %v358, %v361
      %v363 = vrot.slane %v362, 4
      %v365 = vshll.u32 %v337, 16
      %v367 = vrot.slane %v365, 5
      %v368 = vsel %vm354, %v363, %v367
      %v370 = vshrl.u32 %v338, 16
      %v372 = vrot.slane %v370, 4
      %v373 = vshll.u32 %v338, 16
      %v375 = vrot.slane %v373, 5
      %v376 = vor.u32 %v372, %v375
      %v377 = vrot.slane %v376, 4
      %v379 = vshll.u32 %v339, 16
      %v381 = vrot.slane %v379, 5
      %v382 = vsel %vm354, %v377, %v381
      %v384 = vshrl.u32 %v340, 16
      %v386 = vrot.slane %v384, 4
      %v387 = vshll.u32 %v340, 16
      %v389 = vrot.slane %v387, 5
      %v390 = vor.u32 %v386, %v389
      %v391 = vrot.slane %v390, 4
      %v393 = vshll.u32 %v341, 16
      %v395 = vrot.slane %v393, 5
      %v396 = vsel %vm354, %v391, %v395
      %v398 = vshrl.u32 %v342, 16
      %v400 = vrot.slane %v398, 4
      %v401 = vshll.u32 %v342, 16
      %v403 = vrot.slane %v401, 5
      %v404 = vor.u32 %v400, %v403
      %v405 = vrot.slane %v404, 4
      %v407 = vshll.u32 %v343, 16
      %v409 = vrot.slane %v407, 5
      %v410 = vsel %vm354, %v405, %v409
      %v412 = vshrl.u32 %v344, 16
      %v414 = vrot.slane %v412, 4
      %v415 = vshll.u32 %v344, 16
      %v417 = vrot.slane %v415, 5
      %v418 = vor.u32 %v414, %v417
      %v419 = vrot.slane %v418, 4
      %v421 = vshll.u32 %v345, 16
      %v423 = vrot.slane %v421, 5
      %v424 = vsel %vm354, %v419, %v423
      %v426 = vshrl.u32 %v346, 16
      %v428 = vrot.slane %v426, 4
      %v429 = vshll.u32 %v346, 16
      %v431 = vrot.slane %v429, 5
      %v432 = vor.u32 %v428, %v431
      %v433 = vrot.slane %v432, 4
      %v435 = vshll.u32 %v347, 16
      %v437 = vrot.slane %v435, 5
      %v438 = vsel %vm354, %v433, %v437
      %v440 = vshrl.u32 %v348, 16
      %v442 = vrot.slane %v440, 4
      %v443 = vshll.u32 %v348, 16
      %v445 = vrot.slane %v443, 5
      %v446 = vor.u32 %v442, %v445
      %v447 = vrot.slane %v446, 4
      %v449 = vshll.u32 %v349, 16
      %v451 = vrot.slane %v449, 5
      %v452 = vsel %vm354, %v447, %v451
      %v454 = vshrl.u32 %v350, 16
      %v456 = vrot.slane %v454, 4
      %v457 = vshll.u32 %v350, 16
      %v459 = vrot.slane %v457, 5
      %v460 = vor.u32 %v456, %v459
      %v461 = vrot.slane %v460, 4
      %v463 = vshll.u32 %v351, 16
      %v465 = vrot.slane %v463, 5
      %v466 = vsel %vm354, %v461, %v465
      %467 = vrot.lane.b32.xlu0 %v368, 24
      %v468 = vpop.permute.xlu0 %467
      %469 = vrot.lane.b32.xlu0 %v382, 24
      %v470 = vpop.permute.xlu0 %469
      %471 = vrot.lane.b32.xlu0 %v396, 24
      %v472 = vpop.permute.xlu0 %471
      %473 = vrot.lane.b32.xlu0 %v410, 24
      %v474 = vpop.permute.xlu0 %473
      %475 = vrot.lane.b32.xlu0 %v424, 24
      %v476 = vpop.permute.xlu0 %475
      %477 = vrot.lane.b32.xlu0 %v438, 24
      %v478 = vpop.permute.xlu0 %477
      %479 = vrot.lane.b32.xlu0 %v452, 24
      %v480 = vpop.permute.xlu0 %479
      %481 = vrot.lane.b32.xlu0 %v466, 24
      %v482 = vpop.permute.xlu0 %481
      %vm491 = vcmask 224448
      %492 = vst.msk [vmem:[#allocation2] sm:$0xf] %vm491, %v468
      %493 = vst.msk [vmem:[#allocation2 + $0x4] sm:$0xf] %vm491, %v470
      %494 = vst.msk [vmem:[#allocation2 + $0x8] sm:$0xf] %vm491, %v472
      %495 = vst.msk [vmem:[#allocation2 + $0xc] sm:$0xf] %vm491, %v474
      %496 = vst.msk [vmem:[#allocation2 + $0x10] sm:$0xf] %vm491, %v476
      %497 = vst.msk [vmem:[#allocation2 + $0x14] sm:$0xf] %vm491, %v478
      %498 = vst.msk [vmem:[#allocation2 + $0x18] sm:$0xf] %vm491, %v480
      %499 = vst.msk [vmem:[#allocation2 + $0x1c] sm:$0xf] %vm491, %v482
      %s500 = scalar_lea.vmem %s287, 8
      %v501 = vld [vmem:[%s500] sm:$0xf]
      %v502 = vld [vmem:[%s500 + $0x10] sm:$0xf]
      %v503 = vld [vmem:[%s500 + $0x20] sm:$0xf]
      %v504 = vld [vmem:[%s500 + $0x30] sm:$0xf]
      %v505 = vld [vmem:[%s500 + $0x40] sm:$0xf]
      %v506 = vld [vmem:[%s500 + $0x50] sm:$0xf]
      %v507 = vld [vmem:[%s500 + $0x60] sm:$0xf]
      %v508 = vld [vmem:[%s500 + $0x70] sm:$0xf]
      %517 = vrot.lane.b32.xlu0 %v501, 8
      %v518 = vpop.permute.xlu0 %517
      %519 = vrot.lane.b32.xlu0 %v502, 8
      %v520 = vpop.permute.xlu0 %519
      %521 = vrot.lane.b32.xlu0 %v503, 8
      %v522 = vpop.permute.xlu0 %521
      %523 = vrot.lane.b32.xlu0 %v504, 8
      %v524 = vpop.permute.xlu0 %523
      %525 = vrot.lane.b32.xlu0 %v505, 8
      %v526 = vpop.permute.xlu0 %525
      %527 = vrot.lane.b32.xlu0 %v506, 8
      %v528 = vpop.permute.xlu0 %527
      %529 = vrot.lane.b32.xlu0 %v507, 8
      %v530 = vpop.permute.xlu0 %529
      %531 = vrot.lane.b32.xlu0 %v508, 8
      %v532 = vpop.permute.xlu0 %531
      %vm541 = vcmask 126016
      %542 = vst.msk [vmem:[#allocation2] sm:$0xf] %vm541, %v518
      %543 = vst.msk [vmem:[#allocation2 + $0x4] sm:$0xf] %vm541, %v520
      %544 = vst.msk [vmem:[#allocation2 + $0x8] sm:$0xf] %vm541, %v522
      %545 = vst.msk [vmem:[#allocation2 + $0xc] sm:$0xf] %vm541, %v524
      %546 = vst.msk [vmem:[#allocation2 + $0x10] sm:$0xf] %vm541, %v526
      %547 = vst.msk [vmem:[#allocation2 + $0x14] sm:$0xf] %vm541, %v528
      %548 = vst.msk [vmem:[#allocation2 + $0x18] sm:$0xf] %vm541, %v530
      %549 = vst.msk [vmem:[#allocation2 + $0x1c] sm:$0xf] %vm541, %v532
      %v550 = vld [vmem:[%s500] sm:$0xf]
      %v551 = vld [vmem:[%s500 + $0x4] sm:$0x1]
      %v552 = vld [vmem:[%s500 + $0x10] sm:$0xf]
      %v553 = vld [vmem:[%s500 + $0x14] sm:$0x1]
      %v554 = vld [vmem:[%s500 + $0x20] sm:$0xf]
      %v555 = vld [vmem:[%s500 + $0x24] sm:$0x1]
      %v556 = vld [vmem:[%s500 + $0x30] sm:$0xf]
      %v557 = vld [vmem:[%s500 + $0x34] sm:$0x1]
      %v558 = vld [vmem:[%s500 + $0x40] sm:$0xf]
      %v559 = vld [vmem:[%s500 + $0x44] sm:$0x1]
      %v560 = vld [vmem:[%s500 + $0x50] sm:$0xf]
      %v561 = vld [vmem:[%s500 + $0x54] sm:$0x1]
      %v562 = vld [vmem:[%s500 + $0x60] sm:$0xf]
      %v563 = vld [vmem:[%s500 + $0x64] sm:$0x1]
      %v564 = vld [vmem:[%s500 + $0x70] sm:$0xf]
      %v565 = vld [vmem:[%s500 + $0x74] sm:$0x1]
      %v567 = vshrl.u32 %v550, 16
      %v569 = vrot.slane %v567, 4
      %v570 = vshll.u32 %v550, 16
      %v572 = vrot.slane %v570, 5
      %v573 = vor.u32 %v569, %v572
      %v574 = vrot.slane %v573, 4
      %v576 = vshll.u32 %v551, 16
      %v578 = vrot.slane %v576, 5
      %v579 = vsel %vm354, %v574, %v578
      %v581 = vshrl.u32 %v552, 16
      %v583 = vrot.slane %v581, 4
      %v584 = vshll.u32 %v552, 16
      %v586 = vrot.slane %v584, 5
      %v587 = vor.u32 %v583, %v586
      %v588 = vrot.slane %v587, 4
      %v590 = vshll.u32 %v553, 16
      %v592 = vrot.slane %v590, 5
      %v593 = vsel %vm354, %v588, %v592
      %v595 = vshrl.u32 %v554, 16
      %v597 = vrot.slane %v595, 4
      %v598 = vshll.u32 %v554, 16
      %v600 = vrot.slane %v598, 5
      %v601 = vor.u32 %v597, %v600
      %v602 = vrot.slane %v601, 4
      %v604 = vshll.u32 %v555, 16
      %v606 = vrot.slane %v604, 5
      %v607 = vsel %vm354, %v602, %v606
      %v609 = vshrl.u32 %v556, 16
      %v611 = vrot.slane %v609, 4
      %v612 = vshll.u32 %v556, 16
      %v614 = vrot.slane %v612, 5
      %v615 = vor.u32 %v611, %v614
      %v616 = vrot.slane %v615, 4
      %v618 = vshll.u32 %v557, 16
      %v620 = vrot.slane %v618, 5
      %v621 = vsel %vm354, %v616, %v620
      %v623 = vshrl.u32 %v558, 16
      %v625 = vrot.slane %v623, 4
      %v626 = vshll.u32 %v558, 16
      %v628 = vrot.slane %v626, 5
      %v629 = vor.u32 %v625, %v628
      %v630 = vrot.slane %v629, 4
      %v632 = vshll.u32 %v559, 16
      %v634 = vrot.slane %v632, 5
      %v635 = vsel %vm354, %v630, %v634
      %v637 = vshrl.u32 %v560, 16
      %v639 = vrot.slane %v637, 4
      %v640 = vshll.u32 %v560, 16
      %v642 = vrot.slane %v640, 5
      %v643 = vor.u32 %v639, %v642
      %v644 = vrot.slane %v643, 4
      %v646 = vshll.u32 %v561, 16
      %v648 = vrot.slane %v646, 5
      %v649 = vsel %vm354, %v644, %v648
      %v651 = vshrl.u32 %v562, 16
      %v653 = vrot.slane %v651, 4
      %v654 = vshll.u32 %v562, 16
      %v656 = vrot.slane %v654, 5
      %v657 = vor.u32 %v653, %v656
      %v658 = vrot.slane %v657, 4
      %v660 = vshll.u32 %v563, 16
      %v662 = vrot.slane %v660, 5
      %v663 = vsel %vm354, %v658, %v662
      %v665 = vshrl.u32 %v564, 16
      %v667 = vrot.slane %v665, 4
      %v668 = vshll.u32 %v564, 16
      %v670 = vrot.slane %v668, 5
      %v671 = vor.u32 %v667, %v670
      %v672 = vrot.slane %v671, 4
      %v674 = vshll.u32 %v565, 16
      %v676 = vrot.slane %v674, 5
      %v677 = vsel %vm354, %v672, %v676
      %678 = vrot.lane.b32.xlu0 %v579, 28
      %v679 = vpop.permute.xlu0 %678
      %680 = vrot.lane.b32.xlu0 %v593, 28
      %v681 = vpop.permute.xlu0 %680
      %682 = vrot.lane.b32.xlu0 %v607, 28
      %v683 = vpop.permute.xlu0 %682
      %684 = vrot.lane.b32.xlu0 %v621, 28
      %v685 = vpop.permute.xlu0 %684
      %686 = vrot.lane.b32.xlu0 %v635, 28
      %v687 = vpop.permute.xlu0 %686
      %688 = vrot.lane.b32.xlu0 %v649, 28
      %v689 = vpop.permute.xlu0 %688
      %690 = vrot.lane.b32.xlu0 %v663, 28
      %v691 = vpop.permute.xlu0 %690
      %692 = vrot.lane.b32.xlu0 %v677, 28
      %v693 = vpop.permute.xlu0 %692
      %vm702 = vcmask 257248
      %703 = vst.msk [vmem:[#allocation2] sm:$0xf] %vm702, %v679
      %704 = vst.msk [vmem:[#allocation2 + $0x4] sm:$0xf] %vm702, %v681
      %705 = vst.msk [vmem:[#allocation2 + $0x8] sm:$0xf] %vm702, %v683
      %706 = vst.msk [vmem:[#allocation2 + $0xc] sm:$0xf] %vm702, %v685
      %707 = vst.msk [vmem:[#allocation2 + $0x10] sm:$0xf] %vm702, %v687
      %708 = vst.msk [vmem:[#allocation2 + $0x14] sm:$0xf] %vm702, %v689
      %709 = vst.msk [vmem:[#allocation2 + $0x18] sm:$0xf] %vm702, %v691
      %710 = vst.msk [vmem:[#allocation2 + $0x1c] sm:$0xf] %vm702, %v693
      %s711 = scalar_lea.vmem %s287, 16
      %v712 = vld [vmem:[%s711] sm:$0xf]
      %v713 = vld [vmem:[%s711 + $0x10] sm:$0xf]
      %v714 = vld [vmem:[%s711 + $0x20] sm:$0xf]
      %v715 = vld [vmem:[%s711 + $0x30] sm:$0xf]
      %v716 = vld [vmem:[%s711 + $0x40] sm:$0xf]
      %v717 = vld [vmem:[%s711 + $0x50] sm:$0xf]
      %v718 = vld [vmem:[%s711 + $0x60] sm:$0xf]
      %726 = vrot.lane.b32.xlu0 %v712, 16
      %v727 = vpop.permute.xlu0 %726
      %728 = vrot.lane.b32.xlu0 %v713, 16
      %v729 = vpop.permute.xlu0 %728
      %730 = vrot.lane.b32.xlu0 %v714, 16
      %v731 = vpop.permute.xlu0 %730
      %732 = vrot.lane.b32.xlu0 %v715, 16
      %v733 = vpop.permute.xlu0 %732
      %734 = vrot.lane.b32.xlu0 %v716, 16
      %v735 = vpop.permute.xlu0 %734
      %736 = vrot.lane.b32.xlu0 %v717, 16
      %v737 = vpop.permute.xlu0 %736
      %738 = vrot.lane.b32.xlu0 %v718, 16
      %v739 = vpop.permute.xlu0 %738
      %vm747 = vcmask 191616
      %748 = vst.msk [vmem:[#allocation2] sm:$0xf] %vm747, %v727
      %749 = vst.msk [vmem:[#allocation2 + $0x4] sm:$0xf] %vm747, %v729
      %750 = vst.msk [vmem:[#allocation2 + $0x8] sm:$0xf] %vm747, %v731
      %751 = vst.msk [vmem:[#allocation2 + $0xc] sm:$0xf] %vm747, %v733
      %752 = vst.msk [vmem:[#allocation2 + $0x10] sm:$0xf] %vm747, %v735
      %753 = vst.msk [vmem:[#allocation2 + $0x14] sm:$0xf] %vm747, %v737
      %754 = vst.msk [vmem:[#allocation2 + $0x18] sm:$0xf] %vm747, %v739
      %v755 = vld [vmem:[%s711] sm:$0xf]
      %v756 = vld [vmem:[%s711 + $0x4] sm:$0x1]
      %v757 = vld [vmem:[%s711 + $0x10] sm:$0xf]
      %v758 = vld [vmem:[%s711 + $0x14] sm:$0x1]
      %v759 = vld [vmem:[%s711 + $0x20] sm:$0xf]
      %v760 = vld [vmem:[%s711 + $0x24] sm:$0x1]
      %v761 = vld [vmem:[%s711 + $0x30] sm:$0xf]
      %v762 = vld [vmem:[%s711 + $0x34] sm:$0x1]
      %v763 = vld [vmem:[%s711 + $0x40] sm:$0xf]
      %v764 = vld [vmem:[%s711 + $0x44] sm:$0x1]
      %v765 = vld [vmem:[%s711 + $0x50] sm:$0xf]
      %v766 = vld [vmem:[%s711 + $0x54] sm:$0x1]
      %v767 = vld [vmem:[%s711 + $0x60] sm:$0xf]
      %v768 = vld [vmem:[%s711 + $0x64] sm:$0x1]
      %v770 = vshrl.u32 %v755, 16
      %v772 = vrot.slane %v770, 4
      %v773 = vshll.u32 %v755, 16
      %v775 = vrot.slane %v773, 5
      %v776 = vor.u32 %v772, %v775
      %v777 = vrot.slane %v776, 4
      %v779 = vshll.u32 %v756, 16
      %v781 = vrot.slane %v779, 5
      %v782 = vsel %vm354, %v777, %v781
      %v784 = vshrl.u32 %v757, 16
      %v786 = vrot.slane %v784, 4
      %v787 = vshll.u32 %v757, 16
      %v789 = vrot.slane %v787, 5
      %v790 = vor.u32 %v786, %v789
      %v791 = vrot.slane %v790, 4
      %v793 = vshll.u32 %v758, 16
      %v795 = vrot.slane %v793, 5
      %v796 = vsel %vm354, %v791, %v795
      %v798 = vshrl.u32 %v759, 16
      %v800 = vrot.slane %v798, 4
      %v801 = vshll.u32 %v759, 16
      %v803 = vrot.slane %v801, 5
      %v804 = vor.u32 %v800, %v803
      %v805 = vrot.slane %v804, 4
      %v807 = vshll.u32 %v760, 16
      %v809 = vrot.slane %v807, 5
      %v810 = vsel %vm354, %v805, %v809
      %v812 = vshrl.u32 %v761, 16
      %v814 = vrot.slane %v812, 4
      %v815 = vshll.u32 %v761, 16
      %v817 = vrot.slane %v815, 5
      %v818 = vor.u32 %v814, %v817
      %v819 = vrot.slane %v818, 4
      %v821 = vshll.u32 %v762, 16
      %v823 = vrot.slane %v821, 5
      %v824 = vsel %vm354, %v819, %v823
      %v826 = vshrl.u32 %v763, 16
      %v828 = vrot.slane %v826, 4
      %v829 = vshll.u32 %v763, 16
      %v831 = vrot.slane %v829, 5
      %v832 = vor.u32 %v828, %v831
      %v833 = vrot.slane %v832, 4
      %v835 = vshll.u32 %v764, 16
      %v837 = vrot.slane %v835, 5
      %v838 = vsel %vm354, %v833, %v837
      %v840 = vshrl.u32 %v765, 16
      %v842 = vrot.slane %v840, 4
      %v843 = vshll.u32 %v765, 16
      %v845 = vrot.slane %v843, 5
      %v846 = vor.u32 %v842, %v845
      %v847 = vrot.slane %v846, 4
      %v849 = vshll.u32 %v766, 16
      %v851 = vrot.slane %v849, 5
      %v852 = vsel %vm354, %v847, %v851
      %v854 = vshrl.u32 %v767, 16
      %v856 = vrot.slane %v854, 4
      %v857 = vshll.u32 %v767, 16
      %v859 = vrot.slane %v857, 5
      %v860 = vor.u32 %v856, %v859
      %v861 = vrot.slane %v860, 4
      %v863 = vshll.u32 %v768, 16
      %v865 = vrot.slane %v863, 5
      %v866 = vsel %vm354, %v861, %v865
      %867 = vrot.lane.b32.xlu0 %v782, 32
      %v868 = vpop.permute.xlu0 %867
      %869 = vrot.lane.b32.xlu0 %v796, 32
      %v870 = vpop.permute.xlu0 %869
      %871 = vrot.lane.b32.xlu0 %v810, 32
      %v872 = vpop.permute.xlu0 %871
      %873 = vrot.lane.b32.xlu0 %v824, 32
      %v874 = vpop.permute.xlu0 %873
      %875 = vrot.lane.b32.xlu0 %v838, 32
      %v876 = vpop.permute.xlu0 %875
      %877 = vrot.lane.b32.xlu0 %v852, 32
      %v878 = vpop.permute.xlu0 %877
      %879 = vrot.lane.b32.xlu0 %v866, 32
      %v880 = vpop.permute.xlu0 %879
      %vm888 = vcmask 290048
      %889 = vst.msk [vmem:[#allocation2] sm:$0xf] %vm888, %v868
      %890 = vst.msk [vmem:[#allocation2 + $0x4] sm:$0xf] %vm888, %v870
      %891 = vst.msk [vmem:[#allocation2 + $0x8] sm:$0xf] %vm888, %v872
      %892 = vst.msk [vmem:[#allocation2 + $0xc] sm:$0xf] %vm888, %v874
      %893 = vst.msk [vmem:[#allocation2 + $0x10] sm:$0xf] %vm888, %v876
      %894 = vst.msk [vmem:[#allocation2 + $0x14] sm:$0xf] %vm888, %v878
      %895 = vst.msk [vmem:[#allocation2 + $0x18] sm:$0xf] %vm888, %v880
      %v896 = vld [vmem:[%s305] sm:$0xf]
      %898 = vrot.lane.b32.xlu0 %v896, 16
      %v899 = vpop.permute.xlu0 %898
      %s901 = scalar_lea.vmem [#allocation2], 28
      %902 = vst.msk [vmem:[%s901] sm:$0xf] %vm747, %v899
      %v903 = vld [vmem:[%s305] sm:$0xf]
      %v904 = vld [vmem:[%s305 + $0x4] sm:$0x1]
      %v906 = vshrl.u32 %v903, 16
      %v908 = vrot.slane %v906, 4
      %v909 = vshll.u32 %v903, 16
      %v911 = vrot.slane %v909, 5
      %v912 = vor.u32 %v908, %v911
      %v913 = vrot.slane %v912, 4
      %v915 = vshll.u32 %v904, 16
      %v917 = vrot.slane %v915, 5
      %v918 = vsel %vm354, %v913, %v917
      %919 = vrot.lane.b32.xlu0 %v918, 32
      %v920 = vpop.permute.xlu0 %919
      %922 = vst.msk [vmem:[%s901] sm:$0xf] %vm888, %v920
      %v923 = vld [vmem:[#allocation2] sm:$0xf]
      %v924 = vld [vmem:[#allocation2 + $0x4] sm:$0xf]
      %v925 = vld [vmem:[#allocation2 + $0x8] sm:$0xf]
      %v926 = vld [vmem:[#allocation2 + $0xc] sm:$0xf]
      %v927 = vld [vmem:[#allocation2 + $0x10] sm:$0xf]
      %v928 = vld [vmem:[#allocation2 + $0x14] sm:$0xf]
      %v929 = vld [vmem:[#allocation2 + $0x18] sm:$0xf]
      %v930 = vld [vmem:[#allocation2 + $0x1c] sm:$0xf]
      %v931 = vld [vmem:[%s2] sm:$0xf]
      %v932 = vld [vmem:[%s2 + $0x4] sm:$0xf]
      %v933 = vld [vmem:[%s2 + $0x8] sm:$0xf]
      %v934 = vld [vmem:[%s2 + $0xc] sm:$0xf]
      %v935 = vld [vmem:[%s2 + $0x10] sm:$0x3]
      %v936 = vld [vmem:[%s3] sm:$0x1]
      %v938 = vlaneseq
      %v939 = vshrl.u32 %v938, 7
      %v940 = vsub.s32 0, %v939
      %v941 = vrot.slane %v936, %v940
      %v951 = vunpack.c.l.b16 %v923
      %v952 = vunpack.c.l.b16 %v924
      %v953 = vunpack.c.l.b16 %v925
      %v954 = vunpack.c.l.b16 %v926
      %v955 = vunpack.c.l.b16 %v927
      %v956 = vunpack.c.l.b16 %v928
      %v957 = vunpack.c.l.b16 %v929
      %v958 = vunpack.c.l.b16 %v930
      %v959 = vpack.c.b16 %v952, %v951
      %v960 = vpack.c.b16 %v954, %v953
      %v961 = vpack.c.b16 %v956, %v955
      %v962 = vpack.c.b16 %v958, %v957
      %v968 = vunpack.c.l.b16 %v931
      %v969 = vunpack.c.l.b16 %v932
      %v970 = vunpack.c.l.b16 %v933
      %v971 = vunpack.c.l.b16 %v934
      %v972 = vunpack.c.l.b16 %v935
      %v973 = vpack.c.b16 %v969, %v968
      %v974 = vpack.c.b16 %v971, %v970
      %v975 = vpack.c.b16 %v972, %v972
      %vm978 = vcmask 293888
      %v980 = vsel %vm978, %v959, 0
      %v983 = vsel %vm978, %v960, 0
      %v986 = vsel %vm978, %v961, 0
      %v989 = vsel %vm978, %v962, 0
      %vm991 = vcmask 1041408
      %v993 = vsel %vm991, %v975, 0
      %995 = vmatprep.subr.bf16.mxu0 0
      %996 = vmatpush1.bf16.msra.mxu0 0
      %997 = vmatprep.subr.bf16.mxu0 0
      %998 = vmatpush1.bf16.msra.mxu0 0
      %999 = vmatprep.subr.bf16.mxu0 0
      %1000 = vmatpush1.bf16.msra.mxu0 0
      %1001 = vmatprep.subr.bf16.mxu0 0
      %1002 = vmatpush1.bf16.msra.mxu0 0
      %1003 = vmatprep.subr.bf16.mxu0 0
      %1004 = vmatpush1.bf16.msra.mxu0 0
      %1005 = vmatprep.subr.bf16.mxu0 0
      %1006 = vmatpush1.bf16.msra.mxu0 %v993
      %1007 = vmatprep.subr.bf16.mxu0 0
      %1008 = vmatpush1.bf16.msra.mxu0 %v974
      %1009 = vmatprep.subr.bf16.mxu0 0
      %1010 = vmatpush1.bf16.msra.mxu0 %v973
      %1011 = vmatprep.subr.bf16.mxu0 0
      %1012 = vmatpush2.bf16.msra.mxu0 0
      %1013 = vmatprep.subr.bf16.mxu0 0
      %1014 = vmatpush2.bf16.msra.mxu0 0
      %1015 = vmatprep.subr.bf16.mxu0 0
      %1016 = vmatpush2.bf16.msra.mxu0 0
      %1017 = vmatprep.subr.bf16.mxu0 0
      %1018 = vmatpush2.bf16.msra.mxu0 0
      %1019 = vmatprep.subr.bf16.mxu0 0
      %1020 = vmatpush2.bf16.msra.mxu0 0
      %1021 = vmatprep.subr.bf16.mxu0 0
      %1022 = vmatpush2.bf16.msra.mxu0 0
      %1023 = vmatprep.subr.bf16.mxu0 0
      %1024 = vmatpush2.bf16.msra.mxu0 0
      %1025 = vmatprep.subr.bf16.mxu0 0
      %1026 = vmatpush2.bf16.msra.mxu0 0
      %1027 = vmatprep.mubr.bf16.mxu0 0
      %1028 = vmatmul.mubr.bf16.gmra.mxu0 %v980
      %v1029 = vpop.f32.mrf.mxu0
      %v1030 = vadd.f32 %v941, %v1029
      %v1031 = vpop.f32.mrf.mxu0
      %v1032 = vpop.f32.mrf.mxu0
      %v1033 = vadd.f32 %v941, %v1032
      %v1034 = vpop.f32.mrf.mxu0
      %1035 = vmatprep.mubr.bf16.mxu0 0
      %1036 = vmatmul.mubr.bf16.gmra.mxu0 %v983
      %v1037 = vpop.f32.mrf.mxu0
      %v1038 = vadd.f32 %v941, %v1037
      %v1039 = vpop.f32.mrf.mxu0
      %v1040 = vpop.f32.mrf.mxu0
      %v1041 = vadd.f32 %v941, %v1040
      %v1042 = vpop.f32.mrf.mxu0
      %1043 = vmatprep.mubr.bf16.mxu0 0
      %1044 = vmatmul.mubr.bf16.gmra.mxu0 %v986
      %v1045 = vpop.f32.mrf.mxu0
      %v1046 = vadd.f32 %v941, %v1045
      %v1047 = vpop.f32.mrf.mxu0
      %v1048 = vpop.f32.mrf.mxu0
      %v1049 = vadd.f32 %v941, %v1048
      %v1050 = vpop.f32.mrf.mxu0
      %1051 = vmatprep.mubr.bf16.mxu0 0
      %1052 = vmatmul.mubr.bf16.gmra.mxu0 %v989
      %v1053 = vpop.f32.mrf.mxu0
      %v1054 = vadd.f32 %v941, %v1053
      %v1055 = vpop.f32.mrf.mxu0
      %v1056 = vpop.f32.mrf.mxu0
      %v1057 = vadd.f32 %v941, %v1056
      %v1058 = vpop.f32.mrf.mxu0
      %1059 = vdwg.mxu0
      %vm1060 = vcmask 64512
      %1061 = vst.msk [vmem:[%s316] sm:$0xff] %vm1060, %v1030
      %1062 = vst.msk [vmem:[%s316 + $0x8] sm:$0xff] %vm1060, %v1033
      %1063 = vst.msk [vmem:[%s316 + $0x10] sm:$0xff] %vm1060, %v1038
      %1064 = vst.msk [vmem:[%s316 + $0x18] sm:$0xff] %vm1060, %v1041
      %1065 = vst.msk [vmem:[%s316 + $0x20] sm:$0xff] %vm1060, %v1046
      %1066 = vst.msk [vmem:[%s316 + $0x28] sm:$0xff] %vm1060, %v1049
      %1067 = vst.msk [vmem:[%s316 + $0x30] sm:$0xff] %vm1060, %v1054
      %1068 = vst.msk [vmem:[%s316 + $0x38] sm:$0xff] %vm1060, %v1057
      %s1069 = smul.u32 8, %s20
      %p1070 = scmp.lt.s32.totalorder %s19, 1
      %s1071 = scalar_select %p1070, %s19, 1
      %p1072 = scmp.lt.s32.totalorder %s1069, 7
      %s1073 = scalar_select %p1072, %s1069, 7
      %s1074 = smul.addr %s1071, 8
      %s1075 = sadd.s32 %s1073, %s1074
      %s1076 = smul.addr %s1075, 8
      %s1077 = scalar_lea.vmem %s4, %s1076
      // Predicated region
      $region37: #{tpu_custom_call.1} parent=35 // pred_check
        %p1078 = pneg %p149
      $region38: #{tpu_custom_call.1} parent=35 // pred_check_branch
        %1080 = sbr.rel (%p1078) target = $region40
      $region39: #{tpu_custom_call.1} parent=35 // pred_region
        %s1081 = smul.u32 8, %s20
      $region40: #{tpu_custom_call.1} parent=35 // pred_fallthru
        _
    $region36: #{tpu_custom_call.1} parent=5 // pred_fallthru
      _
    %p1082 = scmp.le.s32.totalorder 2, %s10
    // Predicated region
    $region41: #{tpu_custom_call.1} parent=5 // pred_check
      %p1083 = pneg %p1082
    $region42: #{tpu_custom_call.1} parent=5 // pred_check_branch
      %1085 = sbr.rel (%p1083) target = $region44
    $region43: #{tpu_custom_call.1} parent=5 // pred_region
      %s1086 = ssub.s32 %s10, 2
      // Predicated region
      $region45: #{tpu_custom_call.1} parent=43 // pred_check
        %p1087 = pneg %p155
      $region46: #{tpu_custom_call.1} parent=43 // pred_check_branch
        %1089 = sbr.rel (%p1087) target = $region48
      $region47: #{tpu_custom_call.1} parent=43 // pred_region
        %s1090 = smul.u32 8, %s22
        %p1091 = scmp.lt.s32.totalorder %s21, 1
        %s1092 = scalar_select %p1091, %s21, 1
        %p1093 = scmp.lt.s32.totalorder %s1090, 7
        %s1094 = scalar_select %p1093, %s1090, 7
        %s1095 = smul.addr %s1092, 8
        %s1096 = sadd.s32 %s1094, %s1095
        %s1097 = smul.addr %s1096, 8
        %s1098 = scalar_lea.vmem %s4, %s1097
      $region48: #{tpu_custom_call.1} parent=43 // pred_fallthru
        _
    $region44: #{tpu_custom_call.1} parent=5 // pred_fallthru
      _
  $region6: #{tpu_custom_call.1} parent=0 // loop_footer
    %s14 = sadd.s32 1, %s10
  $region7: #{tpu_custom_call.1} parent=0 // loop_footer_branch
    %9 = sbr.rel target = $region3
  $region8: #{tpu_custom_call.1} parent=0 // loop_exit
    _

</llo_original>
